<compile_context>
chip_gen: v7x
topology: tpu7x:2x2x1
jax: 0.10.0
libtpu: 0.0.40
codegen_flags: <defaults>
</compile_context>

<pallas_src>
import jax
import jax.numpy as jnp
from jax import lax
from jax.experimental import pallas as pl
from jax.experimental.pallas import tpu as pltpu

_BN_EPS = 1e-5


def _vmem_limit_bytes():
    """~3/4 of physical VMEM: 96 MiB on v5e/v6e (128 MiB), 48 MiB on v7x (64 MiB)."""
    try:
        cap = int(pltpu.get_tpu_info().vmem_capacity_bytes)
    except Exception:
        cap = 64 * 1024 * 1024  # conservative fallback (v7x-sized)
    return (cap * 3) // 4


def _estimate_vmem(tm, batch, in_dim, hidden_dim, out_dim, cbytes, obytes):
    stream = 2 * tm * (in_dim * cbytes + out_dim * obytes)            # x / out tiles, double-buffered
    weights = 2 * (in_dim * hidden_dim + hidden_dim * out_dim) * cbytes  # resident, 2 bufs by default
    scratch = batch * hidden_dim * cbytes + 4 * hidden_dim * 4          # h + sum/ssq/scale/shift
    small = 2 * (hidden_dim + out_dim) * 4 * 2                           # gamma/beta/b2 residents
    return stream + weights + scratch + small


def _pick_block_rows(batch, in_dim, hidden_dim, out_dim, cbytes, obytes,
                     vmem_limit, min_rows):
    budget = int(vmem_limit * 0.8)  # headroom for compiler scratch / semaphores
    candidates = [batch] + [t for t in (2048, 1024, 512, 256, 128, 64, 32, 16)
                            if t >= min_rows]
    for tm in candidates:
        if tm <= 0 or batch % tm:
            continue
        if tm != batch and tm % min_rows:
            continue
        if _estimate_vmem(tm, batch, in_dim, hidden_dim, out_dim,
                          cbytes, obytes) <= budget:
            return tm
    for tm in (min_rows, 8):
        if batch % tm == 0:
            return tm
    return batch


def prediction_mlp(x, w1, b1, gamma, beta, w2, b2, *,
                   block_rows=None, compute_dtype=None, bn_eps=_BN_EPS):
    """x: [B, in_dim] -> [B, out_dim].  Weights in PyTorch layout
    (w1: [hidden, in], w2: [out, hidden]); BatchNorm evaluated in training
    mode (batch statistics, biased variance)."""
    B, in_dim = x.shape
    hidden_dim = w1.shape[0]
    out_dim = w2.shape[0]

    out_dtype = x.dtype
    cdt = jnp.dtype(compute_dtype) if compute_dtype is not None else jnp.dtype(x.dtype)
    cbytes = cdt.itemsize
    obytes = jnp.dtype(out_dtype).itemsize
    min_rows = max(8, 32 // cbytes)  # sublane packing: 8 (f32) / 16 (bf16)

    vmem_limit = _vmem_limit_bytes()
    tm = (_pick_block_rows(B, in_dim, hidden_dim, out_dim, cbytes, obytes,
                           vmem_limit, min_rows)
          if block_rows is None else block_rows)
    if B % tm:
        raise ValueError(f"block_rows={tm} must divide batch={B}")
    if tm != B and tm % min_rows:
        raise ValueError(f"block_rows={tm} must be a multiple of {min_rows} (or full B)")
    if _estimate_vmem(tm, B, in_dim, hidden_dim, out_dim, cbytes, obytes) > vmem_limit:
        # TODO(synk): spill h to HBM (two-pass variant) for very large batches.
        raise ValueError("fused kernel does not fit VMEM for these shapes")
    n_tiles = B // tm
    last = n_tiles - 1

    # Pre-transpose + cast once in the wrapper: the MXU consumes [K, N] directly.
    w1t = w1.T.astype(cdt)                      # [in_dim, hidden_dim]
    w2t = w2.T.astype(cdt)                      # [hidden_dim, out_dim]
    xc = x.astype(cdt)
    gamma2 = gamma.reshape(1, hidden_dim).astype(jnp.float32)
    beta2 = beta.reshape(1, hidden_dim).astype(jnp.float32)
    b2r = b2.reshape(1, out_dim).astype(jnp.float32)
    # b1 is intentionally unused: BatchNorm removes any constant pre-BN offset
    # (shift = beta - mean*scale absorbs it exactly).
    del b1

    inv_b = 1.0 / B

    def kernel(x_ref, w1t_ref, gamma_ref, beta_ref, w2t_ref, b2_ref, o_ref,
               h_scr, sum_scr, ssq_scr, scale_scr, shift_scr):
        p = pl.program_id(0)   # phase: 0 = fc1 + batch stats, 1 = BN + ReLU + fc2
        i = pl.program_id(1)   # batch tile
        row = pl.multiple_of(i * tm, tm)

        @pl.when(p == 0)
        def _fc1_and_stats():
            @pl.when(i == 0)
            def _init():
                sum_scr[...] = jnp.zeros_like(sum_scr)
                ssq_scr[...] = jnp.zeros_like(ssq_scr)

            h = jnp.dot(x_ref[...], w1t_ref[...],
                        preferred_element_type=jnp.float32)
            h_scr[pl.ds(row, tm), :] = h.astype(h_scr.dtype)
            sum_scr[...] += jnp.sum(h, axis=0, keepdims=True)
            ssq_scr[...] += jnp.sum(h * h, axis=0, keepdims=True)

        @pl.when(p == 1)
        def _bn_relu_fc2():
            @pl.when(i == 0)
            def _fold_bn():
                mean = sum_scr[...] * inv_b
                var = jnp.maximum(ssq_scr[...] * inv_b - mean * mean, 0.0)
                scale = gamma_ref[...] * lax.rsqrt(var + bn_eps)
                scale_scr[...] = scale
                shift_scr[...] = beta_ref[...] - mean * scale

            h = h_scr[pl.ds(row, tm), :].astype(jnp.float32)
            hn = jnp.maximum(h * scale_scr[...] + shift_scr[...], 0.0)
            out = jnp.dot(hn.astype(w2t_ref.dtype), w2t_ref[...],
                          preferred_element_type=jnp.float32)
            o_ref[...] = (out + b2_ref[...]).astype(o_ref.dtype)

    return pl.pallas_call(
        kernel,
        grid=(2, n_tiles),
        in_specs=[
            # x: streamed in phase 0; pinned to its last block in phase 1 so no
            # HBM re-fetches happen while it is unused.
            pl.BlockSpec((tm, in_dim), lambda p, i: (i * (1 - p) + last * p, 0)),
            pl.BlockSpec((in_dim, hidden_dim), lambda p, i: (0, 0)),   # w1t resident
            pl.BlockSpec((1, hidden_dim), lambda p, i: (0, 0)),        # gamma resident
            pl.BlockSpec((1, hidden_dim), lambda p, i: (0, 0)),        # beta resident
            pl.BlockSpec((hidden_dim, out_dim), lambda p, i: (0, 0)),  # w2t resident
            pl.BlockSpec((1, out_dim), lambda p, i: (0, 0)),           # b2 resident
        ],
        # out: pinned to block 0 during phase 0 (never written there -> no
        # garbage write-backs), streamed during phase 1.
        out_specs=pl.BlockSpec((tm, out_dim), lambda p, i: (i * p, 0)),
        out_shape=jax.ShapeDtypeStruct((B, out_dim), out_dtype),
        scratch_shapes=[
            pltpu.VMEM((B, hidden_dim), cdt),          # h, resident across both phases
            pltpu.VMEM((1, hidden_dim), jnp.float32),  # batch sum
            pltpu.VMEM((1, hidden_dim), jnp.float32),  # batch sum of squares
            pltpu.VMEM((1, hidden_dim), jnp.float32),  # folded BN scale
            pltpu.VMEM((1, hidden_dim), jnp.float32),  # folded BN shift
        ],
        compiler_params=pltpu.CompilerParams(
            dimension_semantics=("arbitrary", "arbitrary"),
            vmem_limit_bytes=vmem_limit),
    )(xc, w1t, gamma2, beta2, w2t, b2r)


if __name__ == "__main__":
    # Small, hardware-friendly shapes consistent with the module's bottleneck
    # structure (in -> hidden -> out, hidden < in).
    B, in_dim, hidden_dim, out_dim = 128, 256, 128, 256

    key = jax.random.PRNGKey(0)
    kx, k1, k2, k3, k4 = jax.random.split(key, 5)
    x = jax.random.normal(kx, (B, in_dim), jnp.float32)
    w1 = jax.random.normal(k1, (hidden_dim, in_dim), jnp.float32) * 0.05
    b1 = jax.random.normal(k2, (hidden_dim,), jnp.float32) * 0.05
    gamma = jnp.ones((hidden_dim,), jnp.float32)   # BatchNorm1d default weight
    beta = jnp.zeros((hidden_dim,), jnp.float32)   # BatchNorm1d default bias
    w2 = jax.random.normal(k3, (out_dim, hidden_dim), jnp.float32) * 0.05
    b2 = jax.random.normal(k4, (out_dim,), jnp.float32) * 0.05

    # Pure-JAX reference of the same math (PyTorch forward in .train() mode).
    h = x @ w1.T + b1
    mean = h.mean(0, keepdims=True)
    var = ((h - mean) ** 2).mean(0, keepdims=True)
    hn = jnp.maximum((h - mean) / jnp.sqrt(var + _BN_EPS) * gamma + beta, 0.0)
    ref = hn @ w2.T + b2

    # f32 path; block_rows=32 -> grid (2, 4) exercises tiling + phase boundary.
    out = prediction_mlp(x, w1, b1, gamma, beta, w2, b2, block_rows=32)
    jax.block_until_ready(out)
    assert out.shape == (B, out_dim)
    assert jnp.allclose(out, ref, atol=2e-3, rtol=2e-3), \
        float(jnp.max(jnp.abs(out - ref)))

    # bf16 compute path (perf-review item: halves HBM/VMEM traffic, full-rate
    # MXU on v6e/v7x).  Looser tolerance for bf16 input rounding.
    out16 = prediction_mlp(x, w1, b1, gamma, beta, w2, b2,
                           compute_dtype=jnp.bfloat16)
    jax.block_until_ready(out16)
    assert jnp.allclose(out16.astype(jnp.float32), ref, atol=1e-1, rtol=1e-1), \
        float(jnp.max(jnp.abs(out16.astype(jnp.float32) - ref)))

    print("KERNEL_OK")
</pallas_src>

<mosaic_0001>
module attributes {stable_mosaic.version = 11 : i64} {
  func.func @kernel(%arg0: i32, %arg1: i32, %arg2: memref<32x256xf32, #tpu.memory_space<vmem>>, %arg3: memref<256x128xf32, #tpu.memory_space<vmem>>, %arg4: memref<1x128xf32, #tpu.memory_space<vmem>>, %arg5: memref<1x128xf32, #tpu.memory_space<vmem>>, %arg6: memref<128x256xf32, #tpu.memory_space<vmem>>, %arg7: memref<1x256xf32, #tpu.memory_space<vmem>>, %arg8: memref<32x256xf32, #tpu.memory_space<vmem>>, %arg9: memref<128x128xf32, #tpu.memory_space<vmem>>, %arg10: memref<1x128xf32, #tpu.memory_space<vmem>>, %arg11: memref<1x128xf32, #tpu.memory_space<vmem>>, %arg12: memref<1x128xf32, #tpu.memory_space<vmem>>, %arg13: memref<1x128xf32, #tpu.memory_space<vmem>>) attributes {dimension_semantics = [#tpu.dimension_semantics<arbitrary>, #tpu.dimension_semantics<arbitrary>], iteration_bounds = array<i64: 2, 4>, scalar_prefetch = 0 : i64, scratch_operands = 5 : i64, tpu.core_type = #tpu.core_type<tc>, window_params = [{transform_indices = @transform_0, window_bounds = array<i64: 32, 256>}, {pipeline_mode = #tpu.pipeline_mode<synchronous>, transform_indices = @transform_1, window_bounds = array<i64: 256, 128>}, {pipeline_mode = #tpu.pipeline_mode<synchronous>, transform_indices = @transform_2, window_bounds = array<i64: 1, 128>}, {pipeline_mode = #tpu.pipeline_mode<synchronous>, transform_indices = @transform_3, window_bounds = array<i64: 1, 128>}, {pipeline_mode = #tpu.pipeline_mode<synchronous>, transform_indices = @transform_4, window_bounds = array<i64: 128, 256>}, {pipeline_mode = #tpu.pipeline_mode<synchronous>, transform_indices = @transform_5, window_bounds = array<i64: 1, 256>}, {transform_indices = @transform_6, window_bounds = array<i64: 32, 256>}]} {
    %c32_i32 = arith.constant 32 : i32
    %0 = arith.muli %arg1, %c32_i32 : i32
    %1 = tpu.assume_multiple %0, 32 : i32
    %c0_i32 = arith.constant 0 : i32
    %2 = arith.cmpi eq, %arg0, %c0_i32 : i32
    %3 = arith.extui %2 : i1 to i32
    %c0_i32_0 = arith.constant 0 : i32
    %4 = arith.cmpi ne, %3, %c0_i32_0 : i32
    scf.if %4 {
      %c0_i32_2 = arith.constant 0 : i32
      %8 = arith.cmpi eq, %arg1, %c0_i32_2 : i32
      %9 = arith.extui %8 : i1 to i32
      %c0_i32_3 = arith.constant 0 : i32
      %10 = arith.cmpi ne, %9, %c0_i32_3 : i32
      scf.if %10 {
        %cst_18 = arith.constant 0.000000e+00 : f32
        %27 = vector.broadcast %cst_18 : f32 to vector<1x128xf32>
        %c0_19 = arith.constant 0 : index
        %c0_20 = arith.constant 0 : index
        %28 = vector.load %arg10[%c0_19, %c0_20] : memref<1x128xf32, #tpu.memory_space<vmem>>, vector<1x128xf32>
        tpu.vector_store %arg10[%c0_19, %c0_20], %27 {strides = array<i32>} : memref<1x128xf32, #tpu.memory_space<vmem>>, vector<1x128xf32>,
        %cst_21 = arith.constant 0.000000e+00 : f32
        %29 = vector.broadcast %cst_21 : f32 to vector<1x128xf32>
        %c0_22 = arith.constant 0 : index
        %c0_23 = arith.constant 0 : index
        %30 = vector.load %arg11[%c0_22, %c0_23] : memref<1x128xf32, #tpu.memory_space<vmem>>, vector<1x128xf32>
        tpu.vector_store %arg11[%c0_22, %c0_23], %29 {strides = array<i32>} : memref<1x128xf32, #tpu.memory_space<vmem>>, vector<1x128xf32>,
      } else {
      }
      %c0 = arith.constant 0 : index
      %c0_4 = arith.constant 0 : index
      %11 = vector.load %arg2[%c0, %c0_4] : memref<32x256xf32, #tpu.memory_space<vmem>>, vector<32x256xf32>
      %c0_5 = arith.constant 0 : index
      %c0_6 = arith.constant 0 : index
      %12 = vector.load %arg3[%c0_5, %c0_6] : memref<256x128xf32, #tpu.memory_space<vmem>>, vector<256x128xf32>
      %cst = arith.constant dense<0.000000e+00> : vector<32x128xf32>
      %13 = tpu.matmul %11, %12, %cst {dimension_numbers = #tpu.dot_dimension_numbers<[1], [0], [0], [1], [0, 0, 1, 1], [], []>} : vector<32x256xf32>, vector<256x128xf32>, vector<32x128xf32> -> vector<32x128xf32>
      %14 = arith.index_cast %1 : i32 to index
      %c0_7 = arith.constant 0 : index
      %15 = vector.load %arg9[%14, %c0_7] : memref<128x128xf32, #tpu.memory_space<vmem>>, vector<32x128xf32>
      tpu.vector_store %arg9[%14, %c0_7], %13 {strides = array<i32>} : memref<128x128xf32, #tpu.memory_space<vmem>>, vector<32x128xf32>,
      %c0_8 = arith.constant 0 : index
      %c0_9 = arith.constant 0 : index
      %16 = vector.load %arg10[%c0_8, %c0_9] : memref<1x128xf32, #tpu.memory_space<vmem>>, vector<1x128xf32>
      %cst_10 = arith.constant dense<0.000000e+00> : vector<128xf32>
      %17 = vector.multi_reduction <add>, %13, %cst_10 [0] : vector<32x128xf32> to vector<128xf32>
      %18 = vector.shape_cast %17 : vector<128xf32> to vector<1x128xf32>
      %19 = arith.addf %16, %18 : vector<1x128xf32>
      %c0_11 = arith.constant 0 : index
      %c0_12 = arith.constant 0 : index
      %20 = vector.load %arg10[%c0_11, %c0_12] : memref<1x128xf32, #tpu.memory_space<vmem>>, vector<1x128xf32>
      tpu.vector_store %arg10[%c0_11, %c0_12], %19 {strides = array<i32>} : memref<1x128xf32, #tpu.memory_space<vmem>>, vector<1x128xf32>,
      %c0_13 = arith.constant 0 : index
      %c0_14 = arith.constant 0 : index
      %21 = vector.load %arg11[%c0_13, %c0_14] : memref<1x128xf32, #tpu.memory_space<vmem>>, vector<1x128xf32>
      %22 = arith.mulf %13, %13 : vector<32x128xf32>
      %cst_15 = arith.constant dense<0.000000e+00> : vector<128xf32>
      %23 = vector.multi_reduction <add>, %22, %cst_15 [0] : vector<32x128xf32> to vector<128xf32>
      %24 = vector.shape_cast %23 : vector<128xf32> to vector<1x128xf32>
      %25 = arith.addf %21, %24 : vector<1x128xf32>
      %c0_16 = arith.constant 0 : index
      %c0_17 = arith.constant 0 : index
      %26 = vector.load %arg11[%c0_16, %c0_17] : memref<1x128xf32, #tpu.memory_space<vmem>>, vector<1x128xf32>
      tpu.vector_store %arg11[%c0_16, %c0_17], %25 {strides = array<i32>} : memref<1x128xf32, #tpu.memory_space<vmem>>, vector<1x128xf32>,
    } else {
    }
    %c1_i32 = arith.constant 1 : i32
    %5 = arith.cmpi eq, %arg0, %c1_i32 : i32
    %6 = arith.extui %5 : i1 to i32
    %c0_i32_1 = arith.constant 0 : i32
    %7 = arith.cmpi ne, %6, %c0_i32_1 : i32
    scf.if %7 {
      %c0_i32_2 = arith.constant 0 : i32
      %8 = arith.cmpi eq, %arg1, %c0_i32_2 : i32
      %9 = arith.extui %8 : i1 to i32
      %c0_i32_3 = arith.constant 0 : i32
      %10 = arith.cmpi ne, %9, %c0_i32_3 : i32
      scf.if %10 {
        %c0_15 = arith.constant 0 : index
        %c0_16 = arith.constant 0 : index
        %27 = vector.load %arg10[%c0_15, %c0_16] : memref<1x128xf32, #tpu.memory_space<vmem>>, vector<1x128xf32>
        %cst_17 = arith.constant 7.812500e-03 : f32
        %28 = vector.broadcast %cst_17 : f32 to vector<1x128xf32>
        %29 = arith.mulf %27, %28 : vector<1x128xf32>
        %c0_18 = arith.constant 0 : index
        %c0_19 = arith.constant 0 : index
        %30 = vector.load %arg11[%c0_18, %c0_19] : memref<1x128xf32, #tpu.memory_space<vmem>>, vector<1x128xf32>
        %cst_20 = arith.constant 7.812500e-03 : f32
        %31 = vector.broadcast %cst_20 : f32 to vector<1x128xf32>
        %32 = arith.mulf %30, %31 : vector<1x128xf32>
        %33 = arith.mulf %29, %29 : vector<1x128xf32>
        %34 = arith.subf %32, %33 : vector<1x128xf32>
        %cst_21 = arith.constant 0.000000e+00 : f32
        %35 = vector.broadcast %cst_21 : f32 to vector<1x128xf32>
        %36 = arith.maximumf %34, %35 : vector<1x128xf32>
        %c0_22 = arith.constant 0 : index
        %c0_23 = arith.constant 0 : index
        %37 = vector.load %arg4[%c0_22, %c0_23] : memref<1x128xf32, #tpu.memory_space<vmem>>, vector<1x128xf32>
        %cst_24 = arith.constant 9.99999974E-6 : f32
        %38 = vector.broadcast %cst_24 : f32 to vector<1x128xf32>
        %39 = arith.addf %36, %38 : vector<1x128xf32>
        %40 = math.rsqrt %39 : vector<1x128xf32>
        %41 = arith.mulf %37, %40 : vector<1x128xf32>
        %c0_25 = arith.constant 0 : index
        %c0_26 = arith.constant 0 : index
        %42 = vector.load %arg12[%c0_25, %c0_26] : memref<1x128xf32, #tpu.memory_space<vmem>>, vector<1x128xf32>
        tpu.vector_store %arg12[%c0_25, %c0_26], %41 {strides = array<i32>} : memref<1x128xf32, #tpu.memory_space<vmem>>, vector<1x128xf32>,
        %c0_27 = arith.constant 0 : index
        %c0_28 = arith.constant 0 : index
        %43 = vector.load %arg5[%c0_27, %c0_28] : memref<1x128xf32, #tpu.memory_space<vmem>>, vector<1x128xf32>
        %44 = arith.mulf %29, %41 : vector<1x128xf32>
        %45 = arith.subf %43, %44 : vector<1x128xf32>
        %c0_29 = arith.constant 0 : index
        %c0_30 = arith.constant 0 : index
        %46 = vector.load %arg13[%c0_29, %c0_30] : memref<1x128xf32, #tpu.memory_space<vmem>>, vector<1x128xf32>
        tpu.vector_store %arg13[%c0_29, %c0_30], %45 {strides = array<i32>} : memref<1x128xf32, #tpu.memory_space<vmem>>, vector<1x128xf32>,
      } else {
      }
      %11 = arith.index_cast %1 : i32 to index
      %c0 = arith.constant 0 : index
      %12 = vector.load %arg9[%11, %c0] : memref<128x128xf32, #tpu.memory_space<vmem>>, vector<32x128xf32>
      %c0_4 = arith.constant 0 : index
      %c0_5 = arith.constant 0 : index
      %13 = vector.load %arg12[%c0_4, %c0_5] : memref<1x128xf32, #tpu.memory_space<vmem>>, vector<1x128xf32>
      %14 = vector.broadcast %13 : vector<1x128xf32> to vector<32x128xf32>
      %15 = arith.mulf %12, %14 : vector<32x128xf32>
      %c0_6 = arith.constant 0 : index
      %c0_7 = arith.constant 0 : index
      %16 = vector.load %arg13[%c0_6, %c0_7] : memref<1x128xf32, #tpu.memory_space<vmem>>, vector<1x128xf32>
      %17 = vector.broadcast %16 : vector<1x128xf32> to vector<32x128xf32>
      %18 = arith.addf %15, %17 : vector<32x128xf32>
      %cst = arith.constant 0.000000e+00 : f32
      %19 = vector.broadcast %cst : f32 to vector<32x128xf32>
      %20 = arith.maximumf %18, %19 : vector<32x128xf32>
      %c0_8 = arith.constant 0 : index
      %c0_9 = arith.constant 0 : index
      %21 = vector.load %arg6[%c0_8, %c0_9] : memref<128x256xf32, #tpu.memory_space<vmem>>, vector<128x256xf32>
      %cst_10 = arith.constant dense<0.000000e+00> : vector<32x256xf32>
      %22 = tpu.matmul %20, %21, %cst_10 {dimension_numbers = #tpu.dot_dimension_numbers<[1], [0], [0], [1], [0, 0, 1, 1], [], []>} : vector<32x128xf32>, vector<128x256xf32>, vector<32x256xf32> -> vector<32x256xf32>
      %c0_11 = arith.constant 0 : index
      %c0_12 = arith.constant 0 : index
      %23 = vector.load %arg7[%c0_11, %c0_12] : memref<1x256xf32, #tpu.memory_space<vmem>>, vector<1x256xf32>
      %24 = vector.broadcast %23 : vector<1x256xf32> to vector<32x256xf32>
      %25 = arith.addf %22, %24 : vector<32x256xf32>
      %c0_13 = arith.constant 0 : index
      %c0_14 = arith.constant 0 : index
      %26 = vector.load %arg8[%c0_13, %c0_14] : memref<32x256xf32, #tpu.memory_space<vmem>>, vector<32x256xf32>
      tpu.vector_store %arg8[%c0_13, %c0_14], %25 {strides = array<i32>} : memref<32x256xf32, #tpu.memory_space<vmem>>, vector<32x256xf32>,
    } else {
    }
    return
  }
  func.func @transform_0(%arg0: i32, %arg1: i32) -> (i32, i32) {
    %c1_i32 = arith.constant 1 : i32
    %0 = arith.subi %c1_i32, %arg0 : i32
    %1 = arith.muli %arg1, %0 : i32
    %c3_i32 = arith.constant 3 : i32
    %2 = arith.muli %c3_i32, %arg0 : i32
    %3 = arith.addi %1, %2 : i32
    %c0_i32 = arith.constant 0 : i32
    %c0_i32_0 = arith.constant 0 : i32
    return %3, %c0_i32 : i32, i32
  }
  func.func @transform_1(%arg0: i32, %arg1: i32) -> (i32, i32) {
    %c0_i32 = arith.constant 0 : i32
    %c0_i32_0 = arith.constant 0 : i32
    %c0_i32_1 = arith.constant 0 : i32
    return %c0_i32, %c0_i32_0 : i32, i32
  }
  func.func @transform_2(%arg0: i32, %arg1: i32) -> (i32, i32) {
    %c0_i32 = arith.constant 0 : i32
    %c0_i32_0 = arith.constant 0 : i32
    %c0_i32_1 = arith.constant 0 : i32
    return %c0_i32, %c0_i32_0 : i32, i32
  }
  func.func @transform_3(%arg0: i32, %arg1: i32) -> (i32, i32) {
    %c0_i32 = arith.constant 0 : i32
    %c0_i32_0 = arith.constant 0 : i32
    %c0_i32_1 = arith.constant 0 : i32
    return %c0_i32, %c0_i32_0 : i32, i32
  }
  func.func @transform_4(%arg0: i32, %arg1: i32) -> (i32, i32) {
    %c0_i32 = arith.constant 0 : i32
    %c0_i32_0 = arith.constant 0 : i32
    %c0_i32_1 = arith.constant 0 : i32
    return %c0_i32, %c0_i32_0 : i32, i32
  }
  func.func @transform_5(%arg0: i32, %arg1: i32) -> (i32, i32) {
    %c0_i32 = arith.constant 0 : i32
    %c0_i32_0 = arith.constant 0 : i32
    %c0_i32_1 = arith.constant 0 : i32
    return %c0_i32, %c0_i32_0 : i32, i32
  }
  func.func @transform_6(%arg0: i32, %arg1: i32) -> (i32, i32) {
    %0 = arith.muli %arg1, %arg0 : i32
    %c0_i32 = arith.constant 0 : i32
    %c0_i32_0 = arith.constant 0 : i32
    return %0, %c0_i32 : i32, i32
  }
}

</mosaic_0001>

<llo_original>
// kernel: tpu_custom_call.1
$region0: #{tpu_custom_call.1}
  #allocation0 [shape = 'u32[]', space=smem, size = 0x4, offset = 0x4, fixed_abs, tag = 'smem constant byte address 0x4 - core index']
  #allocation1 [shape = 'u32[144,128]{1,0:T(1,128)}', space=vmem, size = 0x12000, scoped, tag = 'internal scratch']
  #allocation2 [shape = 'f32[128,128]{1,0:T(8,128)}', space=vmem, size = 0x10000, scoped, tag = 'scratch operand']
  #allocation3 [shape = 'f32[1,128]{1,0:T(1,128)}', space=vmem, size = 0x200, scoped, tag = 'scratch operand']
  #allocation4 [shape = 'f32[1,128]{1,0:T(1,128)}', space=vmem, size = 0x200, scoped, tag = 'scratch operand']
  #allocation5 [shape = 'f32[1,128]{1,0:T(1,128)}', space=vmem, size = 0x200, scoped, tag = 'scratch operand']
  #allocation6 [shape = 'f32[1,128]{1,0:T(1,128)}', space=vmem, size = 0x200, scoped, tag = 'scratch operand']
  %s0 = inlined_call_operand.hbm [shape: f32[128,256], index: 0, kind: input, shape index: {}]
  %s1 = inlined_call_operand.hbm [shape: f32[256,128], index: 1, kind: input, shape index: {}]
  %s2 = inlined_call_operand.vmem [shape: f32[1,128], index: 2, kind: input, shape index: {}]
  %s3 = inlined_call_operand.vmem [shape: f32[1,128], index: 3, kind: input, shape index: {}]
  %s4 = inlined_call_operand.hbm [shape: f32[128,256], index: 4, kind: input, shape index: {}]
  %s5 = inlined_call_operand.vmem [shape: f32[1,256], index: 5, kind: input, shape index: {}]
  %s6 = inlined_call_operand.hbm [shape: f32[128,256], index: 6, kind: output, shape index: {}]
  %s7 = sld [smem:[#allocation0]]
  $region85: #{tpu_custom_call.1} parent=0
    _
  %s9 = ssub.s32 1, %s7
  %s10 = scalar_select 0, %s9, %s7
  $region1: #{tpu_custom_call.1} parent=0
    #allocation7 [shape = 'u8[65536]{0}', space=vmem, size = 0x10000, scoped, tag = 'input window, operand 0']
    #allocation8 [shape = 's32[2]{0}', space=sflag, size = 0x8, scoped, tag = 'scoped memory for tpu_custom_call.1']
    #allocation9 [shape = 's32[2]{0}', space=sflag, size = 0x8, scoped, tag = 'scoped memory for tpu_custom_call.1']
    #allocation10 [shape = 'u8[131072]{0}', space=vmem, size = 0x20000, scoped, tag = 'input window, operand 1, single buffered']
    #allocation11 [shape = 's32[1]{0}', space=sflag, size = 0x4, scoped, tag = 'scoped memory for tpu_custom_call.1']
    #allocation12 [shape = 'u8[131072]{0}', space=vmem, size = 0x20000, scoped, tag = 'input window, operand 4, single buffered']
    #allocation13 [shape = 'u8[65536]{0}', space=vmem, size = 0x10000, scoped, tag = 'output window, operand 0']
    %11 = vsyncpa [#allocation8], 0
    %s12 = scalar_lea.sflag [#allocation8], 1
    %13 = vsyncpa %s12, 0
    %14 = vsyncpa [#allocation11], 0
    %15 = vsyncpa [#allocation9], 0
    %s16 = scalar_lea.sflag [#allocation9], 1
    %17 = vsyncpa %s16, 0
    loop: start=0, step=1, limit=10
    $region2: #{tpu_custom_call.1} parent=1 // loop_pre_header
      _
    $region3: #{tpu_custom_call.1} parent=1 // loop_header
      %s19 = sphi 0, %s23
      %p20 = scmp.ge.s32.totalorder %s19, 10
      %s26 = sphi 0, %s38
      %s27 = sphi 0, %s34
      %s28 = sphi 0, %s26
      %s29 = sphi 0, %s27
      %s30 = sphi 0, %s28
      %s31 = sphi 0, %s29
      %s49 = sphi 0, %s51
      %s52 = sphi 0, %s49
      %s53 = sphi 0, %s52
      %s69 = sphi 0, %s53
      %s73 = sphi 0, %s73
      %s75 = sphi 0, %s73
      %s76 = sphi 0, %s75
      %s90 = sphi 0, %s76
      %s94 = sphi 0, %s94
      %s96 = sphi 0, %s94
      %s97 = sphi 0, %s96
      %s111 = sphi 0, %s97
      %s115 = sphi 0, %s115
      %s117 = sphi 0, %s115
      %s118 = sphi 0, %s117
      %s132 = sphi 0, %s118
      %s136 = sphi 0, %s136
      %s138 = sphi 0, %s136
      %s139 = sphi 0, %s138
      %s153 = sphi 0, %s139
      %s157 = sphi 0, %s157
      %s159 = sphi 0, %s157
      %s160 = sphi 0, %s159
      %s174 = sphi 0, %s160
      %s182 = sphi 0, %s184
      %s185 = sphi 0, %s182
      %s186 = sphi 0, %s185
      %s202 = sphi 0, %s186
    $region4: #{tpu_custom_call.1} parent=1 // loop_header_branch
      %22 = sbr.rel (%p20) target = $region8
    $region5: #{tpu_custom_call.1} parent=1 // loop_body
      %s24 = ssub.s32 %s19, 1
      %s25 = ssub.s32 %s19, 2
      %s32 = sadd.s32 1, %s27
      %p33 = scmp.ge.s32.totalorder %s32, 4
      %s34 = scalar_select %p33, 0, %s32
      %s35 = sadd.s32 1, %s26
      %s36 = scalar_select %p33, %s35, %s26
      %p37 = scmp.ge.s32.totalorder %s36, 2
      %s38 = scalar_select %p37, 0, %s36
      %s39 = ssub.s32 1, %s26
      %s40 = smul.u32 %s27, %s39
      %s41 = smul.u32 %s26, 3
      %s42 = sadd.s32 %s40, %s41
      %s43 = ssub.s32 1, %s38
      %s44 = smul.u32 %s34, %s43
      %s45 = smul.u32 %s38, 3
      %s46 = sadd.s32 %s44, %s45
      %s47 = ssub.s32 %s42, %s46
      %p48 = scmp.eq.s32.totalorder %s47, 0
      %s50 = sadd.s32 %s49, 1
      %s51 = scalar_select %p48, %s49, %s50
      %p54 = pneg %p48
      %p55 = scmp.eq.s32.totalorder %s19, 7
      %p56 = por %p54, %p55
      %p57 = scmp.ne.s32.totalorder %s49, %s52
      %p58 = scmp.eq.s32.totalorder %s19, 0
      %p59 = por %p57, %p58
      %p60 = scmp.ne.s32.totalorder %s49, %s52
      %p61 = scmp.eq.s32.totalorder %s24, 7
      %p62 = por %p60, %p61
      %p63 = scmp.ne.s32.totalorder %s52, %s53
      %p64 = scmp.eq.s32.totalorder %s24, 0
      %p65 = por %p63, %p64
      %p66 = scmp.ne.s32.totalorder %s52, %s53
      %p67 = scmp.eq.s32.totalorder %s25, 7
      %p68 = por %p66, %p67
      %p70 = scmp.ne.s32.totalorder %s53, %s69
      %p71 = scmp.eq.s32.totalorder %s25, 0
      %p72 = por %p70, %p71
      %s74 = sadd.s32 %s73, 1
      %p77 = scmp.eq.s32.totalorder %s19, 7
      %p78 = scmp.ne.s32.totalorder %s73, %s75
      %p79 = scmp.eq.s32.totalorder %s19, 0
      %p80 = por %p78, %p79
      %p81 = scmp.ne.s32.totalorder %s73, %s75
      %p82 = scmp.eq.s32.totalorder %s24, 7
      %p83 = por %p81, %p82
      %p84 = scmp.ne.s32.totalorder %s75, %s76
      %p85 = scmp.eq.s32.totalorder %s24, 0
      %p86 = por %p84, %p85
      %p87 = scmp.ne.s32.totalorder %s75, %s76
      %p88 = scmp.eq.s32.totalorder %s25, 7
      %p89 = por %p87, %p88
      %p91 = scmp.ne.s32.totalorder %s76, %s90
      %p92 = scmp.eq.s32.totalorder %s25, 0
      %p93 = por %p91, %p92
      %s95 = sadd.s32 %s94, 1
      %p98 = scmp.eq.s32.totalorder %s19, 7
      %p99 = scmp.ne.s32.totalorder %s94, %s96
      %p100 = scmp.eq.s32.totalorder %s19, 0
      %p101 = por %p99, %p100
      %p102 = scmp.ne.s32.totalorder %s94, %s96
      %p103 = scmp.eq.s32.totalorder %s24, 7
      %p104 = por %p102, %p103
      %p105 = scmp.ne.s32.totalorder %s96, %s97
      %p106 = scmp.eq.s32.totalorder %s24, 0
      %p107 = por %p105, %p106
      %p108 = scmp.ne.s32.totalorder %s96, %s97
      %p109 = scmp.eq.s32.totalorder %s25, 7
      %p110 = por %p108, %p109
      %p112 = scmp.ne.s32.totalorder %s97, %s111
      %p113 = scmp.eq.s32.totalorder %s25, 0
      %p114 = por %p112, %p113
      %s116 = sadd.s32 %s115, 1
      %p119 = scmp.eq.s32.totalorder %s19, 7
      %p120 = scmp.ne.s32.totalorder %s115, %s117
      %p121 = scmp.eq.s32.totalorder %s19, 0
      %p122 = por %p120, %p121
      %p123 = scmp.ne.s32.totalorder %s115, %s117
      %p124 = scmp.eq.s32.totalorder %s24, 7
      %p125 = por %p123, %p124
      %p126 = scmp.ne.s32.totalorder %s117, %s118
      %p127 = scmp.eq.s32.totalorder %s24, 0
      %p128 = por %p126, %p127
      %p129 = scmp.ne.s32.totalorder %s117, %s118
      %p130 = scmp.eq.s32.totalorder %s25, 7
      %p131 = por %p129, %p130
      %p133 = scmp.ne.s32.totalorder %s118, %s132
      %p134 = scmp.eq.s32.totalorder %s25, 0
      %p135 = por %p133, %p134
      %s137 = sadd.s32 %s136, 1
      %p140 = scmp.eq.s32.totalorder %s19, 7
      %p141 = scmp.ne.s32.totalorder %s136, %s138
      %p142 = scmp.eq.s32.totalorder %s19, 0
      %p143 = por %p141, %p142
      %p144 = scmp.ne.s32.totalorder %s136, %s138
      %p145 = scmp.eq.s32.totalorder %s24, 7
      %p146 = por %p144, %p145
      %p147 = scmp.ne.s32.totalorder %s138, %s139
      %p148 = scmp.eq.s32.totalorder %s24, 0
      %p149 = por %p147, %p148
      %p150 = scmp.ne.s32.totalorder %s138, %s139
      %p151 = scmp.eq.s32.totalorder %s25, 7
      %p152 = por %p150, %p151
      %p154 = scmp.ne.s32.totalorder %s139, %s153
      %p155 = scmp.eq.s32.totalorder %s25, 0
      %p156 = por %p154, %p155
      %s158 = sadd.s32 %s157, 1
      %p161 = scmp.eq.s32.totalorder %s19, 7
      %p162 = scmp.ne.s32.totalorder %s157, %s159
      %p163 = scmp.eq.s32.totalorder %s19, 0
      %p164 = por %p162, %p163
      %p165 = scmp.ne.s32.totalorder %s157, %s159
      %p166 = scmp.eq.s32.totalorder %s24, 7
      %p167 = por %p165, %p166
      %p168 = scmp.ne.s32.totalorder %s159, %s160
      %p169 = scmp.eq.s32.totalorder %s24, 0
      %p170 = por %p168, %p169
      %p171 = scmp.ne.s32.totalorder %s159, %s160
      %p172 = scmp.eq.s32.totalorder %s25, 7
      %p173 = por %p171, %p172
      %p175 = scmp.ne.s32.totalorder %s160, %s174
      %p176 = scmp.eq.s32.totalorder %s25, 0
      %p177 = por %p175, %p176
      %s178 = smul.u32 %s27, %s26
      %s179 = smul.u32 %s34, %s38
      %s180 = ssub.s32 %s178, %s179
      %p181 = scmp.eq.s32.totalorder %s180, 0
      %s183 = sadd.s32 %s182, 1
      %s184 = scalar_select %p181, %s182, %s183
      %p187 = pneg %p181
      %p188 = scmp.eq.s32.totalorder %s19, 7
      %p189 = por %p187, %p188
      %p190 = scmp.ne.s32.totalorder %s182, %s185
      %p191 = scmp.eq.s32.totalorder %s19, 0
      %p192 = por %p190, %p191
      %p193 = scmp.ne.s32.totalorder %s182, %s185
      %p194 = scmp.eq.s32.totalorder %s24, 7
      %p195 = por %p193, %p194
      %p196 = scmp.ne.s32.totalorder %s185, %s186
      %p197 = scmp.eq.s32.totalorder %s24, 0
      %p198 = por %p196, %p197
      %p199 = scmp.ne.s32.totalorder %s185, %s186
      %p200 = scmp.eq.s32.totalorder %s25, 7
      %p201 = por %p199, %p200
      %p203 = scmp.ne.s32.totalorder %s186, %s202
      %p204 = scmp.eq.s32.totalorder %s25, 0
      %p205 = por %p203, %p204
      %p206 = scmp.le.s32.totalorder 1, %s19
      %p207 = scmp.lt.s32.totalorder %s19, 9
      %p208 = pnand %p206, %p207
      %p209 = pneg %p208
      // Predicated region
      $region9: #{tpu_custom_call.1} parent=5 // pred_check
        _
      $region10: #{tpu_custom_call.1} parent=5 // pred_check_branch
        %211 = sbr.rel (%p208) target = $region12
      $region11: #{tpu_custom_call.1} parent=5 // pred_region
        %s212 = ssub.s32 %s19, 1
        // Predicated region
        $region13: #{tpu_custom_call.1} parent=11 // pred_check
          %p213 = pneg %p86
        $region14: #{tpu_custom_call.1} parent=11 // pred_check_branch
          %215 = sbr.rel (%p213) target = $region16
        $region15: #{tpu_custom_call.1} parent=11 // pred_region
          %s217 = ssub.s32 4096, 4096
          %218 = vsyncadd [#allocation11], %s217
          %s219 = sshll.u32 [#allocation10], 4
          %s220 = int_to_ptr.vmem [resolvable:$true] %s219
          %225 = dma.hbm_to_vmem [thread:$0]  %s1, 4096, %s220, [#allocation11], 128, 128, 8
        $region16: #{tpu_custom_call.1} parent=11 // pred_fallthru
          _
        // Predicated region
        $region17: #{tpu_custom_call.1} parent=11 // pred_check
          %p226 = pneg %p107
        $region18: #{tpu_custom_call.1} parent=11 // pred_check_branch
          %228 = sbr.rel (%p226) target = $region20
        $region19: #{tpu_custom_call.1} parent=11 // pred_region
          _
        $region20: #{tpu_custom_call.1} parent=11 // pred_fallthru
          _
        // Predicated region
        $region21: #{tpu_custom_call.1} parent=11 // pred_check
          %p229 = pneg %p128
        $region22: #{tpu_custom_call.1} parent=11 // pred_check_branch
          %231 = sbr.rel (%p229) target = $region24
        $region23: #{tpu_custom_call.1} parent=11 // pred_region
          _
        $region24: #{tpu_custom_call.1} parent=11 // pred_fallthru
          _
        // Predicated region
        $region25: #{tpu_custom_call.1} parent=11 // pred_check
          %p232 = pneg %p149
        $region26: #{tpu_custom_call.1} parent=11 // pred_check_branch
          %234 = sbr.rel (%p232) target = $region28
        $region27: #{tpu_custom_call.1} parent=11 // pred_region
          %s236 = ssub.s32 4096, 4096
          %237 = vsyncadd [#allocation11], %s236
          %s238 = sshll.u32 [#allocation12], 4
          %s239 = int_to_ptr.vmem [resolvable:$true] %s238
          %244 = dma.hbm_to_vmem [thread:$0]  %s4, 4096, %s239, [#allocation11], 256, 256, 16
        $region28: #{tpu_custom_call.1} parent=11 // pred_fallthru
          _
        // Predicated region
        $region29: #{tpu_custom_call.1} parent=11 // pred_check
          %p245 = pneg %p170
        $region30: #{tpu_custom_call.1} parent=11 // pred_check_branch
          %247 = sbr.rel (%p245) target = $region32
        $region31: #{tpu_custom_call.1} parent=11 // pred_region
          _
        $region32: #{tpu_custom_call.1} parent=11 // pred_fallthru
          _
      $region12: #{tpu_custom_call.1} parent=5 // pred_fallthru
        _
      %p248 = scmp.lt.s32.totalorder %s19, 8
      // Predicated region
      $region33: #{tpu_custom_call.1} parent=5 // pred_check
        %p249 = pneg %p248
      $region34: #{tpu_custom_call.1} parent=5 // pred_check_branch
        %251 = sbr.rel (%p249) target = $region36
      $region35: #{tpu_custom_call.1} parent=5 // pred_region
        // Predicated region
        $region37: #{tpu_custom_call.1} parent=35 // pred_check
          %p252 = pneg %p59
        $region38: #{tpu_custom_call.1} parent=35 // pred_check_branch
          %254 = sbr.rel (%p252) target = $region40
        $region39: #{tpu_custom_call.1} parent=35 // pred_region
          %s255 = sand.u32 %s49, 1
          %s256 = scalar_lea.sflag [#allocation8], %s255
          %s257 = sand.u32 %s49, 1
          %s258 = smul.addr %s257, 64
          %s259 = scalar_lea.vmem [#allocation7], %s258
          %s260 = ssub.s32 1, %s26
          %s261 = smul.u32 %s27, %s260
          %s262 = smul.u32 %s26, 3
          %s263 = sadd.s32 %s261, %s262
          %s264 = smul.u32 4, %s263
          %s266 = ssub.s32 1024, 1024
          %267 = vsyncadd %s256, %s266
          %s268 = smul.addr %s264, 2
          %s269 = smul.addr %s268, 128
          %s270 = scalar_lea.hbm %s0, %s269
          %s271 = sshll.u32 %s259, 4
          %s272 = int_to_ptr.vmem [resolvable:$true] %s271
          %277 = dma.hbm_to_vmem [thread:$0]  %s270, 1024, %s272, %s256, 256, 256, 16
        $region40: #{tpu_custom_call.1} parent=35 // pred_fallthru
          _
      $region36: #{tpu_custom_call.1} parent=5 // pred_fallthru
        _
      %p278 = scmp.le.s32.totalorder 1, %s19
      %p279 = scmp.lt.s32.totalorder %s19, 9
      %p280 = pnand %p278, %p279
      %p281 = pneg %p280
      // Predicated region
      $region41: #{tpu_custom_call.1} parent=5 // pred_check
        _
      $region42: #{tpu_custom_call.1} parent=5 // pred_check_branch
        %283 = sbr.rel (%p280) target = $region44
      $region43: #{tpu_custom_call.1} parent=5 // pred_region
        %s284 = ssub.s32 %s19, 1
        %s285 = sand.u32 %s52, 1
        %s286 = scalar_lea.sflag [#allocation8], %s285
        %s287 = sand.u32 %s52, 1
        %s288 = smul.addr %s287, 64
        %s289 = scalar_lea.vmem [#allocation7], %s288
        // Predicated region
        $region45: #{tpu_custom_call.1} parent=43 // pred_check
          %p290 = pneg %p65
        $region46: #{tpu_custom_call.1} parent=43 // pred_check_branch
          %292 = sbr.rel (%p290) target = $region48
        $region47: #{tpu_custom_call.1} parent=43 // pred_region
          %293 = dma.done %s286, 1024
        $region48: #{tpu_custom_call.1} parent=43 // pred_fallthru
          _
        // Predicated region
        $region49: #{tpu_custom_call.1} parent=43 // pred_check
          %p294 = pneg %p86
        $region50: #{tpu_custom_call.1} parent=43 // pred_check_branch
          %296 = sbr.rel (%p294) target = $region52
        $region51: #{tpu_custom_call.1} parent=43 // pred_region
          %297 = dma.done [#allocation11], 4096
        $region52: #{tpu_custom_call.1} parent=43 // pred_fallthru
          _
        // Predicated region
        $region53: #{tpu_custom_call.1} parent=43 // pred_check
          %p298 = pneg %p149
        $region54: #{tpu_custom_call.1} parent=43 // pred_check_branch
          %300 = sbr.rel (%p298) target = $region56
        $region55: #{tpu_custom_call.1} parent=43 // pred_region
          %301 = dma.done [#allocation11], 4096
        $region56: #{tpu_custom_call.1} parent=43 // pred_fallthru
          _
        %s302 = sand.u32 %s52, 1
        %s303 = scalar_lea.sflag [#allocation8], %s302
        %s304 = sand.u32 %s52, 1
        %s305 = smul.addr %s304, 64
        %s306 = scalar_lea.vmem [#allocation7], %s305
        %p307 = pneg %p65
        %p308 = pneg %p62
        %p309 = pneg %p86
        %p310 = pneg %p83
        %p311 = pneg %p107
        %p312 = pneg %p104
        %p313 = pneg %p128
        %p314 = pneg %p125
        %p315 = pneg %p149
        %p316 = pneg %p146
        %p317 = pneg %p170
        %p318 = pneg %p167
        %p319 = pneg %p198
        %p320 = pneg %p195
        %s321 = sand.u32 %s185, 1
        %s322 = scalar_lea.sflag [#allocation9], %s321
        %s323 = sand.u32 %s185, 1
        %s324 = smul.addr %s323, 64
        %s325 = scalar_lea.vmem [#allocation13], %s324
        %s326 = ssub.s32 1, %s28
        %s327 = smul.u32 %s29, %s326
        %s328 = smul.u32 %s28, 3
        %s329 = sadd.s32 %s327, %s328
        %s330 = smul.u32 4, %s329
        %s331 = smul.u32 %s29, %s28
        %s332 = smul.u32 4, %s331
        %s333 = smul.u32 %s29, 32
        %p334 = scmp.eq.s32.totalorder %s28, 0
        // Predicated region
        $region57: #{tpu_custom_call.1} parent=43 // pred_check
          %p335 = pneg %p334
        $region58: #{tpu_custom_call.1} parent=43 // pred_check_branch
          %337 = sbr.rel (%p335) target = $region60
        $region59: #{tpu_custom_call.1} parent=43 // pred_region
          %p338 = scmp.eq.s32.totalorder %s29, 0
          // Predicated region
          $region61: #{tpu_custom_call.1} parent=59 // pred_check
            %p339 = pneg %p338
          $region62: #{tpu_custom_call.1} parent=59 // pred_check_branch
            %341 = sbr.rel (%p339) target = $region64
          $region63: #{tpu_custom_call.1} parent=59 // pred_region
            %342 = vst [vmem:[#allocation3] sm:$0x1] 0.0
            %343 = vst [vmem:[#allocation4] sm:$0x1] 0.0
          $region64: #{tpu_custom_call.1} parent=59 // pred_fallthru
            _
          %v344 = vld [vmem:[%s289] sm:$0xff]
          %v345 = vld [vmem:[%s289 + $0x8] sm:$0xff]
          %v346 = vld [vmem:[%s289 + $0x10] sm:$0xff]
          %v347 = vld [vmem:[%s289 + $0x18] sm:$0xff]
          %v348 = vld [vmem:[%s289 + $0x20] sm:$0xff]
          %v349 = vld [vmem:[%s289 + $0x28] sm:$0xff]
          %v350 = vld [vmem:[%s289 + $0x30] sm:$0xff]
          %v351 = vld [vmem:[%s289 + $0x38] sm:$0xff]
          %v352 = vld [vmem:[#allocation10] sm:$0xff]
          %v353 = vld [vmem:[#allocation10 + $0x8] sm:$0xff]
          %v354 = vld [vmem:[#allocation10 + $0x10] sm:$0xff]
          %v355 = vld [vmem:[#allocation10 + $0x18] sm:$0xff]
          %v356 = vld [vmem:[#allocation10 + $0x20] sm:$0xff]
          %v357 = vld [vmem:[#allocation10 + $0x28] sm:$0xff]
          %v358 = vld [vmem:[#allocation10 + $0x30] sm:$0xff]
          %v359 = vld [vmem:[#allocation10 + $0x38] sm:$0xff]
          %v360 = vld [vmem:[#allocation10 + $0x40] sm:$0xff]
          %v361 = vld [vmem:[#allocation10 + $0x48] sm:$0xff]
          %v362 = vld [vmem:[#allocation10 + $0x50] sm:$0xff]
          %v363 = vld [vmem:[#allocation10 + $0x58] sm:$0xff]
          %v364 = vld [vmem:[#allocation10 + $0x60] sm:$0xff]
          %v365 = vld [vmem:[#allocation10 + $0x68] sm:$0xff]
          %v366 = vld [vmem:[#allocation10 + $0x70] sm:$0xff]
          %v367 = vld [vmem:[#allocation10 + $0x78] sm:$0xff]
          %v368 = vld [vmem:[#allocation10 + $0x80] sm:$0xff]
          %v369 = vld [vmem:[#allocation10 + $0x88] sm:$0xff]
          %v370 = vld [vmem:[#allocation10 + $0x90] sm:$0xff]
          %v371 = vld [vmem:[#allocation10 + $0x98] sm:$0xff]
          %v372 = vld [vmem:[#allocation10 + $0xa0] sm:$0xff]
          %v373 = vld [vmem:[#allocation10 + $0xa8] sm:$0xff]
          %v374 = vld [vmem:[#allocation10 + $0xb0] sm:$0xff]
          %v375 = vld [vmem:[#allocation10 + $0xb8] sm:$0xff]
          %v376 = vld [vmem:[#allocation10 + $0xc0] sm:$0xff]
          %v377 = vld [vmem:[#allocation10 + $0xc8] sm:$0xff]
          %v378 = vld [vmem:[#allocation10 + $0xd0] sm:$0xff]
          %v379 = vld [vmem:[#allocation10 + $0xd8] sm:$0xff]
          %v380 = vld [vmem:[#allocation10 + $0xe0] sm:$0xff]
          %v381 = vld [vmem:[#allocation10 + $0xe8] sm:$0xff]
          %v382 = vld [vmem:[#allocation10 + $0xf0] sm:$0xff]
          %v383 = vld [vmem:[#allocation10 + $0xf8] sm:$0xff]
          %384 = vmatprep.subr.mxu0 0.0
          %385 = vmatpush1.msra.mxu0 %v352
          %386 = vmatprep.subr.mxu0 0.0
          %387 = vmatpush1.msra.mxu0 %v353
          %388 = vmatprep.subr.mxu0 0.0
          %389 = vmatpush1.msra.mxu0 %v354
          %390 = vmatprep.subr.mxu0 0.0
          %391 = vmatpush1.msra.mxu0 %v355
          %392 = vmatprep.subr.mxu0 0.0
          %393 = vmatpush1.msra.mxu0 %v356
          %394 = vmatprep.subr.mxu0 0.0
          %395 = vmatpush1.msra.mxu0 %v357
          %396 = vmatprep.subr.mxu0 0.0
          %397 = vmatpush1.msra.mxu0 %v358
          %398 = vmatprep.subr.mxu0 0.0
          %399 = vmatpush1.msra.mxu0 %v359
          %400 = vmatprep.subr.mxu0 0.0
          %401 = vmatpush1.msra.mxu0 %v360
          %402 = vmatprep.subr.mxu0 0.0
          %403 = vmatpush1.msra.mxu0 %v361
          %404 = vmatprep.subr.mxu0 0.0
          %405 = vmatpush1.msra.mxu0 %v362
          %406 = vmatprep.subr.mxu0 0.0
          %407 = vmatpush1.msra.mxu0 %v363
          %408 = vmatprep.subr.mxu0 0.0
          %409 = vmatpush1.msra.mxu0 %v364
          %410 = vmatprep.subr.mxu0 0.0
          %411 = vmatpush1.msra.mxu0 %v365
          %412 = vmatprep.subr.mxu0 0.0
          %413 = vmatpush1.msra.mxu0 %v366
          %414 = vmatprep.subr.mxu0 0.0
          %415 = vmatpush1.msra.mxu0 %v367
          %416 = vmatprep.subr.mxu0 0.0
          %417 = vmatpush1.msra.mxu0 %v368
          %418 = vmatprep.subr.mxu0 0.0
          %419 = vmatpush1.msra.mxu0 %v369
          %420 = vmatprep.subr.mxu0 0.0
          %421 = vmatpush1.msra.mxu0 %v370
          %422 = vmatprep.subr.mxu0 0.0
          %423 = vmatpush1.msra.mxu0 %v371
          %424 = vmatprep.subr.mxu0 0.0
          %425 = vmatpush1.msra.mxu0 %v372
          %426 = vmatprep.subr.mxu0 0.0
          %427 = vmatpush1.msra.mxu0 %v373
          %428 = vmatprep.subr.mxu0 0.0
          %429 = vmatpush1.msra.mxu0 %v374
          %430 = vmatprep.subr.mxu0 0.0
          %431 = vmatpush1.msra.mxu0 %v375
          %432 = vmatprep.subr.mxu0 0.0
          %433 = vmatpush1.msra.mxu0 %v376
          %434 = vmatprep.subr.mxu0 0.0
          %435 = vmatpush1.msra.mxu0 %v377
          %436 = vmatprep.subr.mxu0 0.0
          %437 = vmatpush1.msra.mxu0 %v378
          %438 = vmatprep.subr.mxu0 0.0
          %439 = vmatpush1.msra.mxu0 %v379
          %440 = vmatprep.subr.mxu0 0.0
          %441 = vmatpush1.msra.mxu0 %v380
          %442 = vmatprep.subr.mxu0 0.0
          %443 = vmatpush1.msra.mxu0 %v381
          %444 = vmatprep.subr.mxu0 0.0
          %445 = vmatpush1.msra.mxu0 %v382
          %446 = vmatprep.subr.mxu0 0.0
          %447 = vmatpush1.msra.mxu0 %v383
          %448 = vmatprep.mubr.f32.mxu0 %v345
          %449 = vmatmul.mubr.f32.gmra.mrb[0].mxu0 %v344
          %v450 = vpop.f32.mrb[0].mxu0
          %v451 = vadd.f32 0.0, %v450
          %v452 = vpop.f32.mrb[0].mxu0
          %453 = vmatprep.mubr.f32.mxu0 %v347
          %454 = vmatmul.mubr.f32.gmra.mrb[0].mxu0 %v346
          %v455 = vpop.f32.mrb[0].mxu0
          %v456 = vadd.f32 0.0, %v455
          %v457 = vpop.f32.mrb[0].mxu0
          %458 = vmatprep.mubr.f32.mxu0 %v349
          %459 = vmatmul.mubr.f32.gmra.mrb[0].mxu0 %v348
          %v460 = vpop.f32.mrb[0].mxu0
          %v461 = vadd.f32 0.0, %v460
          %v462 = vpop.f32.mrb[0].mxu0
          %463 = vmatprep.mubr.f32.mxu0 %v351
          %464 = vmatmul.mubr.f32.gmra.mrb[0].mxu0 %v350
          %v465 = vpop.f32.mrb[0].mxu0
          %v466 = vadd.f32 0.0, %v465
          %v467 = vpop.f32.mrb[0].mxu0
          %468 = vdwg.mxu0
          %s469 = scalar_lea.vmem [#allocation2], %s333
          %470 = vst [vmem:[%s469] sm:$0xff] %v451
          %471 = vst [vmem:[%s469 + $0x8] sm:$0xff] %v456
          %472 = vst [vmem:[%s469 + $0x10] sm:$0xff] %v461
          %473 = vst [vmem:[%s469 + $0x18] sm:$0xff] %v466
          %v474 = vld [vmem:[#allocation3] sm:$0x1]
          %v475 = vadd.f32 %v451, %v456
          %v476 = vadd.f32 %v475, %v461
          %v477 = vadd.f32 %v476, %v466
          %v478 = vrot.slane %v477, 4
          %v479 = vadd.f32 %v477, %v478
          %v480 = vrot.slane %v479, 2
          %v481 = vadd.f32 %v479, %v480
          %v482 = vrot.slane %v481, 1
          %v483 = vadd.f32 %v481, %v482
          %v484 = vadd.f32 %v474, %v483
          %485 = vst [vmem:[#allocation3] sm:$0x1] %v484
          %v486 = vld [vmem:[#allocation4] sm:$0x1]
          %v487 = vmul.f32 %v451, %v451
          %v488 = vmul.f32 %v456, %v456
          %v489 = vmul.f32 %v461, %v461
          %v490 = vmul.f32 %v466, %v466
          %v491 = vadd.f32 %v487, %v488
          %v492 = vadd.f32 %v491, %v489
          %v493 = vadd.f32 %v492, %v490
          %v494 = vrot.slane %v493, 4
          %v495 = vadd.f32 %v493, %v494
          %v496 = vrot.slane %v495, 2
          %v497 = vadd.f32 %v495, %v496
          %v498 = vrot.slane %v497, 1
          %v499 = vadd.f32 %v497, %v498
          %v500 = vadd.f32 %v486, %v499
          %501 = vst [vmem:[#allocation4] sm:$0x1] %v500
        $region60: #{tpu_custom_call.1} parent=43 // pred_fallthru
          _
        %p502 = scmp.eq.s32.totalorder %s28, 1
        // Predicated region
        $region65: #{tpu_custom_call.1} parent=43 // pred_check
          %p503 = pneg %p502
        $region66: #{tpu_custom_call.1} parent=43 // pred_check_branch
          %505 = sbr.rel (%p503) target = $region68
        $region67: #{tpu_custom_call.1} parent=43 // pred_region
          %p506 = scmp.eq.s32.totalorder %s29, 0
          // Predicated region
          $region69: #{tpu_custom_call.1} parent=67 // pred_check
            %p507 = pneg %p506
          $region70: #{tpu_custom_call.1} parent=67 // pred_check_branch
            %509 = sbr.rel (%p507) target = $region72
          $region71: #{tpu_custom_call.1} parent=67 // pred_region
            %v510 = vld [vmem:[#allocation3] sm:$0x1]
            %v511 = vmul.f32 %v510, 0.0078125
            %v512 = vld [vmem:[#allocation4] sm:$0x1]
            %v513 = vmul.f32 %v512, 0.0078125
            %v514 = vmul.f32 %v511, %v511
            %v515 = vsub.f32 %v513, %v514
            %v516 = vmax.f32 %v515, 0.0
            %v517 = vld [vmem:[%s2] sm:$0x1]
            %v518 = vadd.f32 %v516, 1e-05
            %v519 = vrsqrt.pop %v518
            %v520 = vmul.f32 %v517, %v519
            %521 = vst [vmem:[#allocation5] sm:$0x1] %v520
            %v522 = vld [vmem:[%s3] sm:$0x1]
            %v523 = vmul.f32 %v511, %v520
            %v524 = vsub.f32 %v522, %v523
            %525 = vst [vmem:[#allocation6] sm:$0x1] %v524
          $region72: #{tpu_custom_call.1} parent=67 // pred_fallthru
            _
          %s526 = scalar_lea.vmem [#allocation2], %s333
          %v527 = vld [vmem:[%s526] sm:$0xff]
          %v528 = vld [vmem:[%s526 + $0x8] sm:$0xff]
          %v529 = vld [vmem:[%s526 + $0x10] sm:$0xff]
          %v530 = vld [vmem:[%s526 + $0x18] sm:$0xff]
          %v531 = vld [vmem:[#allocation5] sm:$0x1]
          %v533 = vlaneseq
          %v534 = vshrl.u32 %v533, 7
          %v535 = vsub.s32 0, %v534
          %v536 = vrot.slane %v531, %v535
          %v538 = vmul.f32 %v527, %v536
          %v539 = vmul.f32 %v528, %v536
          %v540 = vmul.f32 %v529, %v536
          %v541 = vmul.f32 %v530, %v536
          %v542 = vld [vmem:[#allocation6] sm:$0x1]
          %v544 = vlaneseq
          %v545 = vshrl.u32 %v544, 7
          %v546 = vsub.s32 0, %v545
          %v547 = vrot.slane %v542, %v546
          %v549 = vadd.f32 %v538, %v547
          %v550 = vadd.f32 %v539, %v547
          %v551 = vadd.f32 %v540, %v547
          %v552 = vadd.f32 %v541, %v547
          %v553 = vmax.f32 %v549, 0.0
          %v554 = vmax.f32 %v550, 0.0
          %v555 = vmax.f32 %v551, 0.0
          %v556 = vmax.f32 %v552, 0.0
          %v557 = vld [vmem:[#allocation12] sm:$0xff]
          %v558 = vld [vmem:[#allocation12 + $0x8] sm:$0xff]
          %v559 = vld [vmem:[#allocation12 + $0x10] sm:$0xff]
          %v560 = vld [vmem:[#allocation12 + $0x18] sm:$0xff]
          %v561 = vld [vmem:[#allocation12 + $0x20] sm:$0xff]
          %v562 = vld [vmem:[#allocation12 + $0x28] sm:$0xff]
          %v563 = vld [vmem:[#allocation12 + $0x30] sm:$0xff]
          %v564 = vld [vmem:[#allocation12 + $0x38] sm:$0xff]
          %v565 = vld [vmem:[#allocation12 + $0x40] sm:$0xff]
          %v566 = vld [vmem:[#allocation12 + $0x48] sm:$0xff]
          %v567 = vld [vmem:[#allocation12 + $0x50] sm:$0xff]
          %v568 = vld [vmem:[#allocation12 + $0x58] sm:$0xff]
          %v569 = vld [vmem:[#allocation12 + $0x60] sm:$0xff]
          %v570 = vld [vmem:[#allocation12 + $0x68] sm:$0xff]
          %v571 = vld [vmem:[#allocation12 + $0x70] sm:$0xff]
          %v572 = vld [vmem:[#allocation12 + $0x78] sm:$0xff]
          %v573 = vld [vmem:[#allocation12 + $0x80] sm:$0xff]
          %v574 = vld [vmem:[#allocation12 + $0x88] sm:$0xff]
          %v575 = vld [vmem:[#allocation12 + $0x90] sm:$0xff]
          %v576 = vld [vmem:[#allocation12 + $0x98] sm:$0xff]
          %v577 = vld [vmem:[#allocation12 + $0xa0] sm:$0xff]
          %v578 = vld [vmem:[#allocation12 + $0xa8] sm:$0xff]
          %v579 = vld [vmem:[#allocation12 + $0xb0] sm:$0xff]
          %v580 = vld [vmem:[#allocation12 + $0xb8] sm:$0xff]
          %v581 = vld [vmem:[#allocation12 + $0xc0] sm:$0xff]
          %v582 = vld [vmem:[#allocation12 + $0xc8] sm:$0xff]
          %v583 = vld [vmem:[#allocation12 + $0xd0] sm:$0xff]
          %v584 = vld [vmem:[#allocation12 + $0xd8] sm:$0xff]
          %v585 = vld [vmem:[#allocation12 + $0xe0] sm:$0xff]
          %v586 = vld [vmem:[#allocation12 + $0xe8] sm:$0xff]
          %v587 = vld [vmem:[#allocation12 + $0xf0] sm:$0xff]
          %v588 = vld [vmem:[#allocation12 + $0xf8] sm:$0xff]
          %v589 = vld [vmem:[%s5] sm:$0x3]
          %v591 = vlaneseq
          %v592 = vshrl.u32 %v591, 7
          %v593 = vsub.s32 0, %v592
          %v594 = vrot.slane %v589, %v593
          %v595 = vlaneseq
          %v596 = vshrl.u32 %v595, 7
          %v597 = vsub.s32 1, %v596
          %v598 = vrot.slane %v589, %v597
          %601 = vmatprep.subr.mxu0 %v558
          %602 = vmatpush1.msra.mxu0 %v557
          %603 = vmatprep.subr.mxu0 %v560
          %604 = vmatpush1.msra.mxu0 %v559
          %605 = vmatprep.subr.mxu0 %v562
          %606 = vmatpush1.msra.mxu0 %v561
          %607 = vmatprep.subr.mxu0 %v564
          %608 = vmatpush1.msra.mxu0 %v563
          %609 = vmatprep.subr.mxu0 %v566
          %610 = vmatpush1.msra.mxu0 %v565
          %611 = vmatprep.subr.mxu0 %v568
          %612 = vmatpush1.msra.mxu0 %v567
          %613 = vmatprep.subr.mxu0 %v570
          %614 = vmatpush1.msra.mxu0 %v569
          %615 = vmatprep.subr.mxu0 %v572
          %616 = vmatpush1.msra.mxu0 %v571
          %617 = vmatprep.subr.mxu0 %v574
          %618 = vmatpush1.msra.mxu0 %v573
          %619 = vmatprep.subr.mxu0 %v576
          %620 = vmatpush1.msra.mxu0 %v575
          %621 = vmatprep.subr.mxu0 %v578
          %622 = vmatpush1.msra.mxu0 %v577
          %623 = vmatprep.subr.mxu0 %v580
          %624 = vmatpush1.msra.mxu0 %v579
          %625 = vmatprep.subr.mxu0 %v582
          %626 = vmatpush1.msra.mxu0 %v581
          %627 = vmatprep.subr.mxu0 %v584
          %628 = vmatpush1.msra.mxu0 %v583
          %629 = vmatprep.subr.mxu0 %v586
          %630 = vmatpush1.msra.mxu0 %v585
          %631 = vmatprep.subr.mxu0 %v588
          %632 = vmatpush1.msra.mxu0 %v587
          %633 = vmatprep.subr.mxu0 0.0
          %634 = vmatpush1.msra.mxu0 0.0
          %635 = vmatprep.subr.mxu0 0.0
          %636 = vmatpush1.msra.mxu0 0.0
          %637 = vmatprep.subr.mxu0 0.0
          %638 = vmatpush1.msra.mxu0 0.0
          %639 = vmatprep.subr.mxu0 0.0
          %640 = vmatpush1.msra.mxu0 0.0
          %641 = vmatprep.subr.mxu0 0.0
          %642 = vmatpush1.msra.mxu0 0.0
          %643 = vmatprep.subr.mxu0 0.0
          %644 = vmatpush1.msra.mxu0 0.0
          %645 = vmatprep.subr.mxu0 0.0
          %646 = vmatpush1.msra.mxu0 0.0
          %647 = vmatprep.subr.mxu0 0.0
          %648 = vmatpush1.msra.mxu0 0.0
          %649 = vmatprep.subr.mxu0 0.0
          %650 = vmatpush1.msra.mxu0 0.0
          %651 = vmatprep.subr.mxu0 0.0
          %652 = vmatpush1.msra.mxu0 0.0
          %653 = vmatprep.subr.mxu0 0.0
          %654 = vmatpush1.msra.mxu0 0.0
          %655 = vmatprep.subr.mxu0 0.0
          %656 = vmatpush1.msra.mxu0 0.0
          %657 = vmatprep.subr.mxu0 0.0
          %658 = vmatpush1.msra.mxu0 0.0
          %659 = vmatprep.subr.mxu0 0.0
          %660 = vmatpush1.msra.mxu0 0.0
          %661 = vmatprep.subr.mxu0 0.0
          %662 = vmatpush1.msra.mxu0 0.0
          %663 = vmatprep.subr.mxu0 0.0
          %664 = vmatpush1.msra.mxu0 0.0
          %665 = vmatprep.mubr.f32.mxu0 0.0
          %666 = vmatmul.mubr.f32.gmra.mrb[0].mxu0 %v553
          %v667 = vpop.f32.mrb[0].mxu0
          %v668 = vadd.f32 %v594, %v667
          %v669 = vpop.f32.mrb[0].mxu0
          %v670 = vadd.f32 %v598, %v669
          %671 = vmatprep.mubr.f32.mxu0 0.0
          %672 = vmatmul.mubr.f32.gmra.mrb[0].mxu0 %v554
          %v673 = vpop.f32.mrb[0].mxu0
          %v674 = vadd.f32 %v594, %v673
          %v675 = vpop.f32.mrb[0].mxu0
          %v676 = vadd.f32 %v598, %v675
          %677 = vmatprep.mubr.f32.mxu0 0.0
          %678 = vmatmul.mubr.f32.gmra.mrb[0].mxu0 %v555
          %v679 = vpop.f32.mrb[0].mxu0
          %v680 = vadd.f32 %v594, %v679
          %v681 = vpop.f32.mrb[0].mxu0
          %v682 = vadd.f32 %v598, %v681
          %683 = vmatprep.mubr.f32.mxu0 0.0
          %684 = vmatmul.mubr.f32.gmra.mrb[0].mxu0 %v556
          %v685 = vpop.f32.mrb[0].mxu0
          %v686 = vadd.f32 %v594, %v685
          %v687 = vpop.f32.mrb[0].mxu0
          %v688 = vadd.f32 %v598, %v687
          %689 = vdwg.mxu0
          %690 = vst [vmem:[%s325] sm:$0xff] %v668
          %691 = vst [vmem:[%s325 + $0x8] sm:$0xff] %v670
          %692 = vst [vmem:[%s325 + $0x10] sm:$0xff] %v674
          %693 = vst [vmem:[%s325 + $0x18] sm:$0xff] %v676
          %694 = vst [vmem:[%s325 + $0x20] sm:$0xff] %v680
          %695 = vst [vmem:[%s325 + $0x28] sm:$0xff] %v682
          %696 = vst [vmem:[%s325 + $0x30] sm:$0xff] %v686
          %697 = vst [vmem:[%s325 + $0x38] sm:$0xff] %v688
        $region68: #{tpu_custom_call.1} parent=43 // pred_fallthru
          _
        %s698 = sand.u32 %s185, 1
        %s699 = scalar_lea.sflag [#allocation9], %s698
        %s700 = sand.u32 %s185, 1
        %s701 = smul.addr %s700, 64
        %s702 = scalar_lea.vmem [#allocation13], %s701
        // Predicated region
        $region73: #{tpu_custom_call.1} parent=43 // pred_check
          %p703 = pneg %p195
        $region74: #{tpu_custom_call.1} parent=43 // pred_check_branch
          %705 = sbr.rel (%p703) target = $region76
        $region75: #{tpu_custom_call.1} parent=43 // pred_region
          %s706 = smul.u32 %s29, %s28
          %s707 = smul.u32 4, %s706
          %s709 = ssub.s32 1024, 1024
          %710 = vsyncadd %s699, %s709
          %s711 = smul.addr %s707, 2
          %s712 = smul.addr %s711, 128
          %s713 = scalar_lea.hbm %s6, %s712
          %s714 = sshll.u32 %s702, 4
          %s715 = int_to_ptr.vmem [resolvable:$true] %s714
          %720 = dma.vmem_to_hbm [thread:$0]  %s715, 1024, %s713, %s699, 256, 256, 16
        $region76: #{tpu_custom_call.1} parent=43 // pred_fallthru
          _
      $region44: #{tpu_custom_call.1} parent=5 // pred_fallthru
        _
      %p721 = scmp.le.s32.totalorder 2, %s19
      // Predicated region
      $region77: #{tpu_custom_call.1} parent=5 // pred_check
        %p722 = pneg %p721
      $region78: #{tpu_custom_call.1} parent=5 // pred_check_branch
        %724 = sbr.rel (%p722) target = $region80
      $region79: #{tpu_custom_call.1} parent=5 // pred_region
        %s725 = ssub.s32 %s19, 2
        // Predicated region
        $region81: #{tpu_custom_call.1} parent=79 // pred_check
          %p726 = pneg %p201
        $region82: #{tpu_custom_call.1} parent=79 // pred_check_branch
          %728 = sbr.rel (%p726) target = $region84
        $region83: #{tpu_custom_call.1} parent=79 // pred_region
          %s729 = sand.u32 %s186, 1
          %s730 = scalar_lea.sflag [#allocation9], %s729
          %s731 = sand.u32 %s186, 1
          %s732 = smul.addr %s731, 64
          %s733 = scalar_lea.vmem [#allocation13], %s732
          %734 = dma.done %s730, 1024
        $region84: #{tpu_custom_call.1} parent=79 // pred_fallthru
          _
      $region80: #{tpu_custom_call.1} parent=5 // pred_fallthru
        _
    $region6: #{tpu_custom_call.1} parent=1 // loop_footer
      %s23 = sadd.s32 1, %s19
    $region7: #{tpu_custom_call.1} parent=1 // loop_footer_branch
      %18 = sbr.rel target = $region3
    $region8: #{tpu_custom_call.1} parent=1 // loop_exit
      _
    %735 = vsyncpa [#allocation8], 1
    %s736 = scalar_lea.sflag [#allocation8], 1
    %737 = vsyncpa %s736, 1
    %738 = vsyncpa [#allocation11], 1
    %739 = vsyncpa [#allocation9], 1
    %s740 = scalar_lea.sflag [#allocation9], 1
    %741 = vsyncpa %s740, 1

</llo_original>
